<compile_context>
chip_gen: v6e
topology: v6e:2x2x1
jax: 0.10.0
libtpu: 0.0.40
codegen_flags: <defaults>
</compile_context>

<pallas_src>
import functools

import jax
import jax.numpy as jnp
from jax.experimental import pallas as pl
from jax.experimental.pallas import tpu as pltpu

# Model sizes — linear1 has hard-coded in_features=7 in the PyTorch module,
# so D_IN + Y_LEN + EMBEDDING_DIM must equal 7.
D_IN = 4
Y_LEN = 1
EMBEDDING_NUM = 7
EMBEDDING_DIM = 2
H = 32
D_OUT = 1

# Packed-parameter / fused-input layout.
A_COLS = D_IN + Y_LEN + EMBEDDING_NUM + 1      # x | y | one-hot(day) | 1  -> 13
K1_PAD = ((A_COLS + 7) // 8) * 8               # 16: sublane-aligned layer-1 K
H_PAD = 128                                    # lane-dense hidden / output width
ONE_COL = H_PAD - 1                            # h[:, ONE_COL] == 1 (carries b2)
BIAS_ROW = D_IN + Y_LEN + EMBEDDING_NUM        # 12: input column that is == 1
SLAB_ROWS = K1_PAD + H_PAD                     # 144 (multiple of 8)

assert D_IN + Y_LEN + EMBEDDING_DIM == 7
assert H <= H_PAD - 1 and D_OUT <= H_PAD


def _round_up(n, m):
    return ((n + m - 1) // m) * m


def pack_params(emb_table, w1_t, b1, w2_t, b2):
    """Pack all parameters into one (SLAB_ROWS, 128) f32 slab.

    w1_t: (7, H)      = linear1.weight.T, row order [x(4), y(1), emb(2)]
    b1:   (H,)
    w2_t: (H, D_OUT)  = linear2.weight.T
    b2:   (D_OUT,)
    emb_table: (EMBEDDING_NUM, EMBEDDING_DIM)
    """
    hp = jax.lax.Precision.HIGHEST
    w1_blk = jnp.zeros((K1_PAD, H_PAD), jnp.float32)
    # x and y rows unchanged.
    w1_blk = w1_blk.at[: D_IN + Y_LEN, :H].set(w1_t[: D_IN + Y_LEN])
    # Fold the embedding gather into the weights:
    #   one_hot(day) @ (emb_table @ W1_emb) == emb_table[day] @ W1_emb
    w1_emb = jnp.dot(emb_table, w1_t[D_IN + Y_LEN:], precision=hp)   # (7, H)
    w1_blk = w1_blk.at[D_IN + Y_LEN: D_IN + Y_LEN + EMBEDDING_NUM, :H].set(w1_emb)
    # Bias row (paired with the constant-1 input column) and the "1" that makes
    # h[:, ONE_COL] == relu(1) == 1 so layer 2 can pick up its own bias.
    w1_blk = w1_blk.at[BIAS_ROW, :H].set(b1)
    w1_blk = w1_blk.at[BIAS_ROW, ONE_COL].set(1.0)

    w2_blk = jnp.zeros((H_PAD, H_PAD), jnp.float32)
    w2_blk = w2_blk.at[:H, :D_OUT].set(w2_t)
    w2_blk = w2_blk.at[ONE_COL, :D_OUT].set(b2)

    return jnp.concatenate([w1_blk, w2_blk], axis=0)   # (144, 128)


def _fused_mlp_kernel(x_ref, y_ref, day_ref, params_ref, out_ref):
    bt = x_ref.shape[0]
    # In-kernel "embedding gather": day -> one-hot over EMBEDDING_NUM lanes.
    day = day_ref[...]                                               # (bt, 1) i32
    iota = jax.lax.broadcasted_iota(jnp.int32, (bt, EMBEDDING_NUM), 1)
    onehot = (iota == day).astype(jnp.float32)                       # (bt, 7)
    ones = jnp.ones((bt, 1), jnp.float32)
    pieces = [x_ref[...], y_ref[...], onehot, ones]
    pad_w = K1_PAD - A_COLS
    if pad_w:
        pieces.append(jnp.zeros((bt, pad_w), jnp.float32))
    a = jnp.concatenate(pieces, axis=1)                              # (bt, 16)

    w1 = params_ref[0:K1_PAD, :]                                     # (16, 128)
    w2 = params_ref[K1_PAD:SLAB_ROWS, :]                             # (128, 128)

    h = jnp.dot(a, w1, preferred_element_type=jnp.float32)           # (bt, 128)
    h = jnp.maximum(h, 0.0)                                          # clamp(min=0)
    out = jnp.dot(h, w2, preferred_element_type=jnp.float32)         # (bt, 128)
    out_ref[...] = out.astype(out_ref.dtype)


def _pad_rows(a, n):
    if a.shape[0] == n:
        return a
    pad = jnp.zeros((n - a.shape[0],) + a.shape[1:], a.dtype)
    return jnp.concatenate([a, pad], axis=0)


@functools.partial(jax.jit, static_argnames=("block_b",))
def two_layer_net_forward_batched(params_slab, x, y, day, *, block_b=128):
    """Batched forward: x (B, 4), y (B, 1), day (B,) int -> (B, D_OUT)."""
    B = x.shape[0]
    block_b = min(block_b, _round_up(B, 8))
    b_pad = _round_up(B, block_b)
    grid = (b_pad // block_b,)

    xp = _pad_rows(x.astype(jnp.float32), b_pad)
    yp = _pad_rows(y.astype(jnp.float32).reshape(B, Y_LEN), b_pad)
    dp = _pad_rows(day.astype(jnp.int32).reshape(B, 1), b_pad)

    flops = 2 * b_pad * H_PAD * (K1_PAD + H_PAD)
    bytes_accessed = 4 * (xp.size + yp.size + dp.size + params_slab.size + b_pad * H_PAD)

    out = pl.pallas_call(
        _fused_mlp_kernel,
        out_shape=jax.ShapeDtypeStruct((b_pad, H_PAD), jnp.float32),
        grid=grid,
        in_specs=[
            pl.BlockSpec((block_b, D_IN), lambda i: (i, 0)),
            pl.BlockSpec((block_b, Y_LEN), lambda i: (i, 0)),
            pl.BlockSpec((block_b, 1), lambda i: (i, 0)),
            # Parameter slab: same block every step -> stays resident in VMEM.
            pl.BlockSpec((SLAB_ROWS, H_PAD), lambda i: (0, 0)),
        ],
        out_specs=pl.BlockSpec((block_b, H_PAD), lambda i: (i, 0)),
        compiler_params=pltpu.CompilerParams(
            dimension_semantics=("parallel",)),
        cost_estimate=pl.CostEstimate(
            flops=flops, transcendentals=0, bytes_accessed=bytes_accessed),
    )(xp, yp, dp, params_slab)

    return out[:B, :D_OUT]


def two_layer_net_forward(params_slab, x, y, day):
    """Single-sample forward with the PyTorch module's signature:
    x (4,), y (1,), day (1,) -> (D_OUT,)."""
    out = two_layer_net_forward_batched(
        params_slab, x[None, :], y[None, :], jnp.asarray(day).reshape(1))
    return out[0]


def reference_forward(raw, x, y, day):
    """Pure-JAX reference of the same batched forward pass."""
    hp = jax.lax.Precision.HIGHEST
    emb = raw["emb"][day]                                   # (B, EMBEDDING_DIM)
    xce = jnp.concatenate([x, y, emb], axis=1)              # (B, 7)
    h = jnp.maximum(jnp.dot(xce, raw["w1_t"], precision=hp) + raw["b1"], 0.0)
    return jnp.dot(h, raw["w2_t"], precision=hp) + raw["b2"]


if __name__ == "__main__":
    key = jax.random.PRNGKey(0)
    k_emb, k_w1, k_b1, k_w2, k_b2, k_x, k_y, k_d = jax.random.split(key, 8)

    raw = {
        "emb": jax.random.normal(k_emb, (EMBEDDING_NUM, EMBEDDING_DIM), jnp.float32),
        "w1_t": jax.random.normal(k_w1, (7, H), jnp.float32) * 0.1,       # linear1.weight.T
        "b1": jax.random.normal(k_b1, (H,), jnp.float32) * 0.1,           # linear1.bias
        "w2_t": jax.random.normal(k_w2, (H, D_OUT), jnp.float32) * 0.1,   # linear2.weight.T
        "b2": jax.random.normal(k_b2, (D_OUT,), jnp.float32) * 0.1,       # linear2.bias
    }
    params_slab = pack_params(raw["emb"], raw["w1_t"], raw["b1"],
                              raw["w2_t"], raw["b2"])

    # Batched inputs (small shapes): B samples processed by ONE pallas_call.
    B = 64
    xb = jax.random.normal(k_x, (B, D_IN), jnp.float32)
    yb = jax.random.normal(k_y, (B, Y_LEN), jnp.float32)
    dayb = jax.random.randint(k_d, (B,), 0, EMBEDDING_NUM, dtype=jnp.int32)

    out_b = jax.block_until_ready(
        two_layer_net_forward_batched(params_slab, xb, yb, dayb))
    ref_b = reference_forward(raw, xb, yb, dayb)
    assert out_b.shape == (B, D_OUT)
    assert jnp.allclose(out_b, ref_b, atol=1e-4, rtol=1e-4), (out_b[:4], ref_b[:4])

    # Single-sample path, exactly the original module's forward semantics.
    y1 = jax.block_until_ready(
        two_layer_net_forward(params_slab, xb[0], yb[0], dayb[0:1]))
    assert y1.shape == (D_OUT,)
    assert jnp.allclose(y1, ref_b[0], atol=1e-4, rtol=1e-4), (y1, ref_b[0])

    print("KERNEL_OK")
</pallas_src>

<mosaic_0001>
module attributes {stable_mosaic.version = 11 : i64} {
  func.func @_fused_mlp_kernel(%arg0: i32, %arg1: memref<64x4xf32, #tpu.memory_space<vmem>>, %arg2: memref<64x1xf32, #tpu.memory_space<vmem>>, %arg3: memref<64x1xi32, #tpu.memory_space<vmem>>, %arg4: memref<144x128xf32, #tpu.memory_space<vmem>>, %arg5: memref<64x128xf32, #tpu.memory_space<vmem>>) attributes {dimension_semantics = [#tpu.dimension_semantics<parallel>], iteration_bounds = array<i64: 1>, scalar_prefetch = 0 : i64, scratch_operands = 0 : i64, tpu.core_type = #tpu.core_type<tc>, window_params = [{transform_indices = @transform_0, window_bounds = array<i64: 64, 4>}, {transform_indices = @transform_1, window_bounds = array<i64: 64, 1>}, {transform_indices = @transform_2, window_bounds = array<i64: 64, 1>}, {pipeline_mode = #tpu.pipeline_mode<synchronous>, transform_indices = @transform_3, window_bounds = array<i64: 144, 128>}, {transform_indices = @transform_4, window_bounds = array<i64: 64, 128>}]} {
    %c0 = arith.constant 0 : index
    %c0_0 = arith.constant 0 : index
    %0 = vector.load %arg3[%c0, %c0_0] : memref<64x1xi32, #tpu.memory_space<vmem>>, vector<64x1xi32>
    %1 = tpu.iota {dimensions = array<i32: 1>} : vector<64x7xi32>
    %2 = vector.broadcast %0 : vector<64x1xi32> to vector<64x7xi32>
    %3 = arith.cmpi eq, %1, %2 : vector<64x7xi32>
    %4 = arith.extui %3 : vector<64x7xi1> to vector<64x7xi32>
    %5 = arith.sitofp %4 : vector<64x7xi32> to vector<64x7xf32>
    %cst = arith.constant 1.000000e+00 : f32
    %6 = vector.broadcast %cst : f32 to vector<64x1xf32>
    %c0_1 = arith.constant 0 : index
    %c0_2 = arith.constant 0 : index
    %7 = vector.load %arg1[%c0_1, %c0_2] : memref<64x4xf32, #tpu.memory_space<vmem>>, vector<64x4xf32>
    %c0_3 = arith.constant 0 : index
    %c0_4 = arith.constant 0 : index
    %8 = vector.load %arg2[%c0_3, %c0_4] : memref<64x1xf32, #tpu.memory_space<vmem>>, vector<64x1xf32>
    %cst_5 = arith.constant 0.000000e+00 : f32
    %9 = vector.broadcast %cst_5 : f32 to vector<64x3xf32>
    %10 = tpu.concatenate %7, %8, %5, %6, %9 in 1 : vector<64x4xf32>, vector<64x1xf32>, vector<64x7xf32>, vector<64x1xf32>, vector<64x3xf32> -> vector<64x16xf32>
    %c0_6 = arith.constant 0 : index
    %c0_7 = arith.constant 0 : index
    %11 = vector.load %arg4[%c0_6, %c0_7] : memref<144x128xf32, #tpu.memory_space<vmem>>, vector<16x128xf32>
    %c16 = arith.constant 16 : index
    %c0_8 = arith.constant 0 : index
    %12 = vector.load %arg4[%c16, %c0_8] : memref<144x128xf32, #tpu.memory_space<vmem>>, vector<128x128xf32>
    %cst_9 = arith.constant dense<0.000000e+00> : vector<64x128xf32>
    %13 = tpu.matmul %10, %11, %cst_9 {dimension_numbers = #tpu.dot_dimension_numbers<[1], [0], [0], [1], [0, 0, 1, 1], [], []>} : vector<64x16xf32>, vector<16x128xf32>, vector<64x128xf32> -> vector<64x128xf32>
    %cst_10 = arith.constant 0.000000e+00 : f32
    %14 = vector.broadcast %cst_10 : f32 to vector<64x128xf32>
    %15 = arith.maximumf %13, %14 : vector<64x128xf32>
    %cst_11 = arith.constant dense<0.000000e+00> : vector<64x128xf32>
    %16 = tpu.matmul %15, %12, %cst_11 {dimension_numbers = #tpu.dot_dimension_numbers<[1], [0], [0], [1], [0, 0, 1, 1], [], []>} : vector<64x128xf32>, vector<128x128xf32>, vector<64x128xf32> -> vector<64x128xf32>
    %c0_12 = arith.constant 0 : index
    %c0_13 = arith.constant 0 : index
    %17 = vector.load %arg5[%c0_12, %c0_13] : memref<64x128xf32, #tpu.memory_space<vmem>>, vector<64x128xf32>
    tpu.vector_store %arg5[%c0_12, %c0_13], %16 {strides = array<i32>} : memref<64x128xf32, #tpu.memory_space<vmem>>, vector<64x128xf32>,
    return
  }
  func.func @transform_0(%arg0: i32) -> (i32, i32) {
    %c0_i32 = arith.constant 0 : i32
    %c0_i32_0 = arith.constant 0 : i32
    return %arg0, %c0_i32 : i32, i32
  }
  func.func @transform_1(%arg0: i32) -> (i32, i32) {
    %c0_i32 = arith.constant 0 : i32
    %c0_i32_0 = arith.constant 0 : i32
    return %arg0, %c0_i32 : i32, i32
  }
  func.func @transform_2(%arg0: i32) -> (i32, i32) {
    %c0_i32 = arith.constant 0 : i32
    %c0_i32_0 = arith.constant 0 : i32
    return %arg0, %c0_i32 : i32, i32
  }
  func.func @transform_3(%arg0: i32) -> (i32, i32) {
    %c0_i32 = arith.constant 0 : i32
    %c0_i32_0 = arith.constant 0 : i32
    %c0_i32_1 = arith.constant 0 : i32
    return %c0_i32, %c0_i32_0 : i32, i32
  }
  func.func @transform_4(%arg0: i32) -> (i32, i32) {
    %c0_i32 = arith.constant 0 : i32
    %c0_i32_0 = arith.constant 0 : i32
    return %arg0, %c0_i32 : i32, i32
  }
}

</mosaic_0001>

<llo_original>
// kernel: two_layer_net_forward_batched.1
$region0: #{two_layer_net_forward_batched.1}
  #allocation0 [shape = 'u32[]', space=smem, size = 0x4, offset = 0x4, fixed_abs, tag = 'smem constant byte address 0x4 - core index']
  #allocation1 [shape = 'u32[144,128]{1,0:T(1,128)}', space=vmem, size = 0x12000, scoped, tag = 'internal scratch']
  %s0 = inlined_call_operand.vmem [shape: f32[64,4], index: 0, kind: input, shape index: {}]
  %s1 = inlined_call_operand.vmem [shape: f32[64,1], index: 1, kind: input, shape index: {}]
  %s2 = inlined_call_operand.vmem [shape: s32[64,1], index: 2, kind: input, shape index: {}]
  %s3 = inlined_call_operand.vmem [shape: f32[144,128], index: 3, kind: input, shape index: {}]
  %s4 = inlined_call_operand.vmem [shape: f32[64,128], index: 4, kind: output, shape index: {}]
  %s5 = sld [smem:[#allocation0]]
  $region26: #{two_layer_net_forward_batched.1} parent=0
    _
  %s7 = ssub.s32 1, %s5
  %s8 = scalar_select 0, %s7, %s5
  // Predicated region
  $region2: #{two_layer_net_forward_batched.1} parent=0 // pred_check
    _
  $region3: #{two_layer_net_forward_batched.1} parent=0 // pred_check_branch
    %10 = sbr.rel (0) target = $region5
  $region4: #{two_layer_net_forward_batched.1} parent=0 // pred_region
    _
  $region5: #{two_layer_net_forward_batched.1} parent=0 // pred_fallthru
    _
  // Predicated region
  $region6: #{two_layer_net_forward_batched.1} parent=0 // pred_check
    _
  $region7: #{two_layer_net_forward_batched.1} parent=0 // pred_check_branch
    %12 = sbr.rel (0) target = $region9
  $region8: #{two_layer_net_forward_batched.1} parent=0 // pred_region
    _
  $region9: #{two_layer_net_forward_batched.1} parent=0 // pred_fallthru
    _
  // Predicated region
  $region10: #{two_layer_net_forward_batched.1} parent=0 // pred_check
    _
  $region11: #{two_layer_net_forward_batched.1} parent=0 // pred_check_branch
    %14 = sbr.rel (0) target = $region13
  $region12: #{two_layer_net_forward_batched.1} parent=0 // pred_region
    _
  $region13: #{two_layer_net_forward_batched.1} parent=0 // pred_fallthru
    _
  // Predicated region
  $region14: #{two_layer_net_forward_batched.1} parent=0 // pred_check
    _
  $region15: #{two_layer_net_forward_batched.1} parent=0 // pred_check_branch
    %16 = sbr.rel (0) target = $region17
  $region16: #{two_layer_net_forward_batched.1} parent=0 // pred_region
    _
  $region17: #{two_layer_net_forward_batched.1} parent=0 // pred_fallthru
    _
  %v17 = vld [vmem:[%s2] sm:$0xff]
  %v18 = vld [vmem:[%s2 + $0x8] sm:$0xff]
  %v19 = vld [vmem:[%s2 + $0x10] sm:$0xff]
  %v20 = vld [vmem:[%s2 + $0x18] sm:$0xff]
  %v21 = vld [vmem:[%s2 + $0x20] sm:$0xff]
  %v22 = vld [vmem:[%s2 + $0x28] sm:$0xff]
  %v23 = vld [vmem:[%s2 + $0x30] sm:$0xff]
  %v24 = vld [vmem:[%s2 + $0x38] sm:$0xff]
  %v25 = vlaneseq
  %v26 = vand.u32 %v25, 127
  %27 = vset.pattern.permute.xlu0 0
  %28 = vperm.xlu0 %27, %v17
  %v29 = vpop.permute.xlu0 %28
  %30 = vset.pattern.permute.xlu0 0
  %31 = vperm.xlu0 %30, %v18
  %v32 = vpop.permute.xlu0 %31
  %33 = vset.pattern.permute.xlu0 0
  %34 = vperm.xlu0 %33, %v19
  %v35 = vpop.permute.xlu0 %34
  %36 = vset.pattern.permute.xlu0 0
  %37 = vperm.xlu0 %36, %v20
  %v38 = vpop.permute.xlu0 %37
  %39 = vset.pattern.permute.xlu0 0
  %40 = vperm.xlu0 %39, %v21
  %v41 = vpop.permute.xlu0 %40
  %42 = vset.pattern.permute.xlu0 0
  %43 = vperm.xlu0 %42, %v22
  %v44 = vpop.permute.xlu0 %43
  %45 = vset.pattern.permute.xlu0 0
  %46 = vperm.xlu0 %45, %v23
  %v47 = vpop.permute.xlu0 %46
  %48 = vset.pattern.permute.xlu0 0
  %49 = vperm.xlu0 %48, %v24
  %v50 = vpop.permute.xlu0 %49
  %vm51 = vcmp.eq.s32.totalorder %v26, %v29
  %vm52 = vcmp.eq.s32.totalorder %v26, %v32
  %vm53 = vcmp.eq.s32.totalorder %v26, %v35
  %vm54 = vcmp.eq.s32.totalorder %v26, %v38
  %vm55 = vcmp.eq.s32.totalorder %v26, %v41
  %vm56 = vcmp.eq.s32.totalorder %v26, %v44
  %vm57 = vcmp.eq.s32.totalorder %v26, %v47
  %vm58 = vcmp.eq.s32.totalorder %v26, %v50
  %v59 = vsel %vm51, 1, 0
  %v60 = vsel %vm52, 1, 0
  %v61 = vsel %vm53, 1, 0
  %v62 = vsel %vm54, 1, 0
  %v63 = vsel %vm55, 1, 0
  %v64 = vsel %vm56, 1, 0
  %v65 = vsel %vm57, 1, 0
  %v66 = vsel %vm58, 1, 0
  %v67 = vcvt.s32.f32 %v59
  %v68 = vcvt.s32.f32 %v60
  %v69 = vcvt.s32.f32 %v61
  %v70 = vcvt.s32.f32 %v62
  %v71 = vcvt.s32.f32 %v63
  %v72 = vcvt.s32.f32 %v64
  %v73 = vcvt.s32.f32 %v65
  %v74 = vcvt.s32.f32 %v66
  %v75 = vld [vmem:[%s0] sm:$0xff]
  %v76 = vld [vmem:[%s0 + $0x8] sm:$0xff]
  %v77 = vld [vmem:[%s0 + $0x10] sm:$0xff]
  %v78 = vld [vmem:[%s0 + $0x18] sm:$0xff]
  %v79 = vld [vmem:[%s0 + $0x20] sm:$0xff]
  %v80 = vld [vmem:[%s0 + $0x28] sm:$0xff]
  %v81 = vld [vmem:[%s0 + $0x30] sm:$0xff]
  %v82 = vld [vmem:[%s0 + $0x38] sm:$0xff]
  %v83 = vld [vmem:[%s1] sm:$0xff]
  %v84 = vld [vmem:[%s1 + $0x8] sm:$0xff]
  %v85 = vld [vmem:[%s1 + $0x10] sm:$0xff]
  %v86 = vld [vmem:[%s1 + $0x18] sm:$0xff]
  %v87 = vld [vmem:[%s1 + $0x20] sm:$0xff]
  %v88 = vld [vmem:[%s1 + $0x28] sm:$0xff]
  %v89 = vld [vmem:[%s1 + $0x30] sm:$0xff]
  %v90 = vld [vmem:[%s1 + $0x38] sm:$0xff]
  %99 = vrot.lane.b32.xlu0 %v83, 4
  %v100 = vpop.permute.xlu0 %99
  %101 = vrot.lane.b32.xlu0 %v84, 4
  %v102 = vpop.permute.xlu0 %101
  %103 = vrot.lane.b32.xlu0 %v85, 4
  %v104 = vpop.permute.xlu0 %103
  %105 = vrot.lane.b32.xlu0 %v86, 4
  %v106 = vpop.permute.xlu0 %105
  %107 = vrot.lane.b32.xlu0 %v87, 4
  %v108 = vpop.permute.xlu0 %107
  %109 = vrot.lane.b32.xlu0 %v88, 4
  %v110 = vpop.permute.xlu0 %109
  %111 = vrot.lane.b32.xlu0 %v89, 4
  %v112 = vpop.permute.xlu0 %111
  %113 = vrot.lane.b32.xlu0 %v90, 4
  %v114 = vpop.permute.xlu0 %113
  %131 = vrot.lane.b32.xlu0 %v67, 5
  %v132 = vpop.permute.xlu0 %131
  %133 = vrot.lane.b32.xlu0 %v68, 5
  %v134 = vpop.permute.xlu0 %133
  %135 = vrot.lane.b32.xlu0 %v69, 5
  %v136 = vpop.permute.xlu0 %135
  %137 = vrot.lane.b32.xlu0 %v70, 5
  %v138 = vpop.permute.xlu0 %137
  %139 = vrot.lane.b32.xlu0 %v71, 5
  %v140 = vpop.permute.xlu0 %139
  %141 = vrot.lane.b32.xlu0 %v72, 5
  %v142 = vpop.permute.xlu0 %141
  %143 = vrot.lane.b32.xlu0 %v73, 5
  %v144 = vpop.permute.xlu0 %143
  %145 = vrot.lane.b32.xlu0 %v74, 5
  %v146 = vpop.permute.xlu0 %145
  %vm155 = vcmask 31744
  %v156 = vsel %vm155, %v75, %v100
  %v157 = vsel %vm155, %v76, %v102
  %v158 = vsel %vm155, %v77, %v104
  %v159 = vsel %vm155, %v78, %v106
  %v160 = vsel %vm155, %v79, %v108
  %v161 = vsel %vm155, %v80, %v110
  %v162 = vsel %vm155, %v81, %v112
  %v163 = vsel %vm155, %v82, %v114
  %vm164 = vcmask 39936
  %v165 = vsel %vm164, %v156, %v132
  %v166 = vsel %vm164, %v157, %v134
  %v167 = vsel %vm164, %v158, %v136
  %v168 = vsel %vm164, %v159, %v138
  %v169 = vsel %vm164, %v160, %v140
  %v170 = vsel %vm164, %v161, %v142
  %v171 = vsel %vm164, %v162, %v144
  %v172 = vsel %vm164, %v163, %v146
  %vm173 = vcmask 97280
  %v174 = vsel %vm173, %v165, 1.0
  %v175 = vsel %vm173, %v166, 1.0
  %v176 = vsel %vm173, %v167, 1.0
  %v177 = vsel %vm173, %v168, 1.0
  %v178 = vsel %vm173, %v169, 1.0
  %v179 = vsel %vm173, %v170, 1.0
  %v180 = vsel %vm173, %v171, 1.0
  %v181 = vsel %vm173, %v172, 1.0
  %vm182 = vcmask 105472
  %v183 = vsel %vm182, %v174, 0.0
  %v184 = vsel %vm182, %v175, 0.0
  %v185 = vsel %vm182, %v176, 0.0
  %v186 = vsel %vm182, %v177, 0.0
  %v187 = vsel %vm182, %v178, 0.0
  %v188 = vsel %vm182, %v179, 0.0
  %v189 = vsel %vm182, %v180, 0.0
  %v190 = vsel %vm182, %v181, 0.0
  %v191 = vld [vmem:[%s3] sm:$0xff]
  %v192 = vld [vmem:[%s3 + $0x8] sm:$0xff]
  %v193 = vld [vmem:[%s3 + $0x10] sm:$0xff]
  %v194 = vld [vmem:[%s3 + $0x18] sm:$0xff]
  %v195 = vld [vmem:[%s3 + $0x20] sm:$0xff]
  %v196 = vld [vmem:[%s3 + $0x28] sm:$0xff]
  %v197 = vld [vmem:[%s3 + $0x30] sm:$0xff]
  %v198 = vld [vmem:[%s3 + $0x38] sm:$0xff]
  %v199 = vld [vmem:[%s3 + $0x40] sm:$0xff]
  %v200 = vld [vmem:[%s3 + $0x48] sm:$0xff]
  %v201 = vld [vmem:[%s3 + $0x50] sm:$0xff]
  %v202 = vld [vmem:[%s3 + $0x58] sm:$0xff]
  %v203 = vld [vmem:[%s3 + $0x60] sm:$0xff]
  %v204 = vld [vmem:[%s3 + $0x68] sm:$0xff]
  %v205 = vld [vmem:[%s3 + $0x70] sm:$0xff]
  %v206 = vld [vmem:[%s3 + $0x78] sm:$0xff]
  %v207 = vld [vmem:[%s3 + $0x80] sm:$0xff]
  %v208 = vld [vmem:[%s3 + $0x88] sm:$0xff]
  %vm209 = vcmask 130048
  %v211 = vsel %vm209, %v183, 0
  %v214 = vsel %vm209, %v184, 0
  %v217 = vsel %vm209, %v185, 0
  %v220 = vsel %vm209, %v186, 0
  %v223 = vsel %vm209, %v187, 0
  %v226 = vsel %vm209, %v188, 0
  %v229 = vsel %vm209, %v189, 0
  %v232 = vsel %vm209, %v190, 0
  %234 = vmatprep.subr.mxu0 0.0
  %235 = vmatpush1.msra.mxu0 0.0
  %236 = vmatprep.subr.mxu0 0.0
  %237 = vmatpush1.msra.mxu0 0.0
  %238 = vmatprep.subr.mxu0 0.0
  %239 = vmatpush1.msra.mxu0 0.0
  %240 = vmatprep.subr.mxu0 0.0
  %241 = vmatpush1.msra.mxu0 0.0
  %242 = vmatprep.subr.mxu0 0.0
  %243 = vmatpush1.msra.mxu0 0.0
  %244 = vmatprep.subr.mxu0 0.0
  %245 = vmatpush1.msra.mxu0 0.0
  %246 = vmatprep.subr.mxu0 0.0
  %247 = vmatpush1.msra.mxu0 0.0
  %248 = vmatprep.subr.mxu0 0.0
  %249 = vmatpush1.msra.mxu0 0.0
  %250 = vmatprep.subr.mxu0 0.0
  %251 = vmatpush1.msra.mxu0 0.0
  %252 = vmatprep.subr.mxu0 0.0
  %253 = vmatpush1.msra.mxu0 0.0
  %254 = vmatprep.subr.mxu0 0.0
  %255 = vmatpush1.msra.mxu0 0.0
  %256 = vmatprep.subr.mxu0 0.0
  %257 = vmatpush1.msra.mxu0 0.0
  %258 = vmatprep.subr.mxu0 0.0
  %259 = vmatpush1.msra.mxu0 0.0
  %260 = vmatprep.subr.mxu0 0.0
  %261 = vmatpush1.msra.mxu0 0.0
  %262 = vmatprep.subr.mxu0 0.0
  %263 = vmatpush1.msra.mxu0 %v192
  %264 = vmatprep.subr.mxu0 0.0
  %265 = vmatpush1.msra.mxu0 %v191
  %266 = vmatprep.subr.mxu0 0.0
  %267 = vmatpush2.msra.mxu0 0.0
  %268 = vmatprep.subr.mxu0 0.0
  %269 = vmatpush2.msra.mxu0 0.0
  %270 = vmatprep.subr.mxu0 0.0
  %271 = vmatpush2.msra.mxu0 0.0
  %272 = vmatprep.subr.mxu0 0.0
  %273 = vmatpush2.msra.mxu0 0.0
  %274 = vmatprep.subr.mxu0 0.0
  %275 = vmatpush2.msra.mxu0 0.0
  %276 = vmatprep.subr.mxu0 0.0
  %277 = vmatpush2.msra.mxu0 0.0
  %278 = vmatprep.subr.mxu0 0.0
  %279 = vmatpush2.msra.mxu0 0.0
  %280 = vmatprep.subr.mxu0 0.0
  %281 = vmatpush2.msra.mxu0 0.0
  %282 = vmatprep.subr.mxu0 0.0
  %283 = vmatpush2.msra.mxu0 0.0
  %284 = vmatprep.subr.mxu0 0.0
  %285 = vmatpush2.msra.mxu0 0.0
  %286 = vmatprep.subr.mxu0 0.0
  %287 = vmatpush2.msra.mxu0 0.0
  %288 = vmatprep.subr.mxu0 0.0
  %289 = vmatpush2.msra.mxu0 0.0
  %290 = vmatprep.subr.mxu0 0.0
  %291 = vmatpush2.msra.mxu0 0.0
  %292 = vmatprep.subr.mxu0 0.0
  %293 = vmatpush2.msra.mxu0 0.0
  %294 = vmatprep.subr.mxu0 0.0
  %295 = vmatpush2.msra.mxu0 0.0
  %296 = vmatprep.subr.mxu0 0.0
  %297 = vmatpush2.msra.mxu0 0.0
  %298 = vmatprep.mubr.f32.mxu0 0.0
  %299 = vmatmul.mubr.f32.gmra.mxu0 %v211
  %v300 = vpop.f32.mrf.mxu0
  %v301 = vadd.f32 0.0, %v300
  %v302 = vpop.f32.mrf.mxu0
  %303 = vmatprep.mubr.f32.mxu0 0.0
  %304 = vmatmul.mubr.f32.gmra.mxu0 %v214
  %v305 = vpop.f32.mrf.mxu0
  %v306 = vadd.f32 0.0, %v305
  %v307 = vpop.f32.mrf.mxu0
  %308 = vmatprep.mubr.f32.mxu0 0.0
  %309 = vmatmul.mubr.f32.gmra.mxu0 %v217
  %v310 = vpop.f32.mrf.mxu0
  %v311 = vadd.f32 0.0, %v310
  %v312 = vpop.f32.mrf.mxu0
  %313 = vmatprep.mubr.f32.mxu0 0.0
  %314 = vmatmul.mubr.f32.gmra.mxu0 %v220
  %v315 = vpop.f32.mrf.mxu0
  %v316 = vadd.f32 0.0, %v315
  %v317 = vpop.f32.mrf.mxu0
  %318 = vmatprep.mubr.f32.mxu0 0.0
  %319 = vmatmul.mubr.f32.gmra.mxu0 %v223
  %v320 = vpop.f32.mrf.mxu0
  %v321 = vadd.f32 0.0, %v320
  %v322 = vpop.f32.mrf.mxu0
  %323 = vmatprep.mubr.f32.mxu0 0.0
  %324 = vmatmul.mubr.f32.gmra.mxu0 %v226
  %v325 = vpop.f32.mrf.mxu0
  %v326 = vadd.f32 0.0, %v325
  %v327 = vpop.f32.mrf.mxu0
  %328 = vmatprep.mubr.f32.mxu0 0.0
  %329 = vmatmul.mubr.f32.gmra.mxu0 %v229
  %v330 = vpop.f32.mrf.mxu0
  %v331 = vadd.f32 0.0, %v330
  %v332 = vpop.f32.mrf.mxu0
  %333 = vmatprep.mubr.f32.mxu0 0.0
  %334 = vmatmul.mubr.f32.gmra.mxu0 %v232
  %v335 = vpop.f32.mrf.mxu0
  %v336 = vadd.f32 0.0, %v335
  %v337 = vpop.f32.mrf.mxu0
  %338 = vdwg.mxu0
  %v339 = vmax.f32 %v301, 0.0
  %v340 = vmax.f32 %v306, 0.0
  %v341 = vmax.f32 %v311, 0.0
  %v342 = vmax.f32 %v316, 0.0
  %v343 = vmax.f32 %v321, 0.0
  %v344 = vmax.f32 %v326, 0.0
  %v345 = vmax.f32 %v331, 0.0
  %v346 = vmax.f32 %v336, 0.0
  %347 = vmatprep.subr.mxu0 0.0
  %348 = vmatpush1.msra.mxu0 %v208
  %349 = vmatprep.subr.mxu0 0.0
  %350 = vmatpush1.msra.mxu0 %v207
  %351 = vmatprep.subr.mxu0 0.0
  %352 = vmatpush1.msra.mxu0 %v206
  %353 = vmatprep.subr.mxu0 0.0
  %354 = vmatpush1.msra.mxu0 %v205
  %355 = vmatprep.subr.mxu0 0.0
  %356 = vmatpush1.msra.mxu0 %v204
  %357 = vmatprep.subr.mxu0 0.0
  %358 = vmatpush1.msra.mxu0 %v203
  %359 = vmatprep.subr.mxu0 0.0
  %360 = vmatpush1.msra.mxu0 %v202
  %361 = vmatprep.subr.mxu0 0.0
  %362 = vmatpush1.msra.mxu0 %v201
  %363 = vmatprep.subr.mxu0 0.0
  %364 = vmatpush1.msra.mxu0 %v200
  %365 = vmatprep.subr.mxu0 0.0
  %366 = vmatpush1.msra.mxu0 %v199
  %367 = vmatprep.subr.mxu0 0.0
  %368 = vmatpush1.msra.mxu0 %v198
  %369 = vmatprep.subr.mxu0 0.0
  %370 = vmatpush1.msra.mxu0 %v197
  %371 = vmatprep.subr.mxu0 0.0
  %372 = vmatpush1.msra.mxu0 %v196
  %373 = vmatprep.subr.mxu0 0.0
  %374 = vmatpush1.msra.mxu0 %v195
  %375 = vmatprep.subr.mxu0 0.0
  %376 = vmatpush1.msra.mxu0 %v194
  %377 = vmatprep.subr.mxu0 0.0
  %378 = vmatpush1.msra.mxu0 %v193
  %379 = vmatprep.subr.mxu0 0.0
  %380 = vmatpush2.msra.mxu0 0.0
  %381 = vmatprep.subr.mxu0 0.0
  %382 = vmatpush2.msra.mxu0 0.0
  %383 = vmatprep.subr.mxu0 0.0
  %384 = vmatpush2.msra.mxu0 0.0
  %385 = vmatprep.subr.mxu0 0.0
  %386 = vmatpush2.msra.mxu0 0.0
  %387 = vmatprep.subr.mxu0 0.0
  %388 = vmatpush2.msra.mxu0 0.0
  %389 = vmatprep.subr.mxu0 0.0
  %390 = vmatpush2.msra.mxu0 0.0
  %391 = vmatprep.subr.mxu0 0.0
  %392 = vmatpush2.msra.mxu0 0.0
  %393 = vmatprep.subr.mxu0 0.0
  %394 = vmatpush2.msra.mxu0 0.0
  %395 = vmatprep.subr.mxu0 0.0
  %396 = vmatpush2.msra.mxu0 0.0
  %397 = vmatprep.subr.mxu0 0.0
  %398 = vmatpush2.msra.mxu0 0.0
  %399 = vmatprep.subr.mxu0 0.0
  %400 = vmatpush2.msra.mxu0 0.0
  %401 = vmatprep.subr.mxu0 0.0
  %402 = vmatpush2.msra.mxu0 0.0
  %403 = vmatprep.subr.mxu0 0.0
  %404 = vmatpush2.msra.mxu0 0.0
  %405 = vmatprep.subr.mxu0 0.0
  %406 = vmatpush2.msra.mxu0 0.0
  %407 = vmatprep.subr.mxu0 0.0
  %408 = vmatpush2.msra.mxu0 0.0
  %409 = vmatprep.subr.mxu0 0.0
  %410 = vmatpush2.msra.mxu0 0.0
  %411 = vmatprep.mubr.f32.mxu0 0.0
  %412 = vmatmul.mubr.f32.gmra.mxu0 %v339
  %v413 = vpop.f32.mrf.mxu0
  %v414 = vadd.f32 0.0, %v413
  %v415 = vpop.f32.mrf.mxu0
  %416 = vmatprep.mubr.f32.mxu0 0.0
  %417 = vmatmul.mubr.f32.gmra.mxu0 %v340
  %v418 = vpop.f32.mrf.mxu0
  %v419 = vadd.f32 0.0, %v418
  %v420 = vpop.f32.mrf.mxu0
  %421 = vmatprep.mubr.f32.mxu0 0.0
  %422 = vmatmul.mubr.f32.gmra.mxu0 %v341
  %v423 = vpop.f32.mrf.mxu0
  %v424 = vadd.f32 0.0, %v423
  %v425 = vpop.f32.mrf.mxu0
  %426 = vmatprep.mubr.f32.mxu0 0.0
  %427 = vmatmul.mubr.f32.gmra.mxu0 %v342
  %v428 = vpop.f32.mrf.mxu0
  %v429 = vadd.f32 0.0, %v428
  %v430 = vpop.f32.mrf.mxu0
  %431 = vmatprep.mubr.f32.mxu0 0.0
  %432 = vmatmul.mubr.f32.gmra.mxu0 %v343
  %v433 = vpop.f32.mrf.mxu0
  %v434 = vadd.f32 0.0, %v433
  %v435 = vpop.f32.mrf.mxu0
  %436 = vmatprep.mubr.f32.mxu0 0.0
  %437 = vmatmul.mubr.f32.gmra.mxu0 %v344
  %v438 = vpop.f32.mrf.mxu0
  %v439 = vadd.f32 0.0, %v438
  %v440 = vpop.f32.mrf.mxu0
  %441 = vmatprep.mubr.f32.mxu0 0.0
  %442 = vmatmul.mubr.f32.gmra.mxu0 %v345
  %v443 = vpop.f32.mrf.mxu0
  %v444 = vadd.f32 0.0, %v443
  %v445 = vpop.f32.mrf.mxu0
  %446 = vmatprep.mubr.f32.mxu0 0.0
  %447 = vmatmul.mubr.f32.gmra.mxu0 %v346
  %v448 = vpop.f32.mrf.mxu0
  %v449 = vadd.f32 0.0, %v448
  %v450 = vpop.f32.mrf.mxu0
  %451 = vdwg.mxu0
  %452 = vst [vmem:[%s4] sm:$0xff] %v414
  %453 = vst [vmem:[%s4 + $0x8] sm:$0xff] %v419
  %454 = vst [vmem:[%s4 + $0x10] sm:$0xff] %v424
  %455 = vst [vmem:[%s4 + $0x18] sm:$0xff] %v429
  %456 = vst [vmem:[%s4 + $0x20] sm:$0xff] %v434
  %457 = vst [vmem:[%s4 + $0x28] sm:$0xff] %v439
  %458 = vst [vmem:[%s4 + $0x30] sm:$0xff] %v444
  %459 = vst [vmem:[%s4 + $0x38] sm:$0xff] %v449
  // Predicated region
  $region18: #{two_layer_net_forward_batched.1} parent=0 // pred_check
    _
  $region19: #{two_layer_net_forward_batched.1} parent=0 // pred_check_branch
    %461 = sbr.rel (0) target = $region21
  $region20: #{two_layer_net_forward_batched.1} parent=0 // pred_region
    _
  $region21: #{two_layer_net_forward_batched.1} parent=0 // pred_fallthru
    _
  // Predicated region
  $region22: #{two_layer_net_forward_batched.1} parent=0 // pred_check
    _
  $region23: #{two_layer_net_forward_batched.1} parent=0 // pred_check_branch
    %463 = sbr.rel (0) target = $region25
  $region24: #{two_layer_net_forward_batched.1} parent=0 // pred_region
    _
  $region25: #{two_layer_net_forward_batched.1} parent=0 // pred_fallthru
    _

</llo_original>
